<compile_context>
chip_gen: v7x
topology: tpu7x:2x2x1
jax: 0.10.0
libtpu: 0.0.40
codegen_flags: <defaults>
</compile_context>

<pallas_src>
import functools

import jax
import jax.numpy as jnp
from jax.experimental import pallas as pl
from jax.experimental.pallas import tpu as pltpu

H = 25   # feature dim (input of alpha_layer / beta_layer)
K = 25   # number of factors
HK = H + K


def factor_decoder_kernel(e_ref, cmu_ref, wsig_ref, szsq_ref,
                          wf_ref, bf_ref, ab_ref, out_ref, *, compute_dtype):
    # e_ref    : (TB, TN, H)   tile of stock embeddings
    # cmu_ref  : (TB, 1, HK)   [w_mu (lanes <H) | mu_z[b] (lanes >=H)]
    # wsig_ref : (1, 1, HK)    [w_sigma | 0]
    # szsq_ref : (TB, 1, HK)   [0 | sigma_z[b]**2]
    # wf_ref   : (H, HK)       fused [W1 | W_beta]  (compute_dtype)
    # bf_ref   : (1, HK)       fused [b1 | b_beta]  (f32)
    # ab_ref   : (1, 2)        [b_mu, b_sigma]
    # out_ref  : (TB, TN, 2)   lane0 = mu_y, lane1 = sigma_y
    tb, tn, hd = e_ref.shape
    hk = wf_ref.shape[1]

    # Single MXU pass: [h_pre | beta] = e @ [W1 | Wb] + [b1 | bb]; cast e in-kernel.
    e2 = e_ref[...].reshape(tb * tn, hd).astype(compute_dtype)
    hb = jnp.dot(e2, wf_ref[...], preferred_element_type=jnp.float32) + bf_ref[...]

    # Masked LeakyReLU on the first H lanes only; beta lanes pass through untouched.
    # (No lane slicing of hb -> no cross-lane relayout of the big tile.)
    lane = jax.lax.broadcasted_iota(jnp.int32, (tb * tn, hk), 1)
    hb = jnp.where(jnp.logical_or(lane >= hd, hb > 0), hb, 0.01 * hb)

    hb3 = hb.reshape(tb, tn, hk)                      # (TB, TN, HK)

    cmu = cmu_ref[...]                                # (TB, 1, HK)
    wsg = wsig_ref[...]                               # (1, 1, HK)
    szq = szsq_ref[...]                               # (TB, 1, HK)
    ab = ab_ref[...]                                  # (1, 2)
    b_mu = ab[0:1, 0:1]                               # (1, 1)
    b_sg = ab[0:1, 1:2]                               # (1, 1)

    # mu_y: ONE fused lane reduce = alpha-head dot (lanes <H) + beta . mu_z (lanes >=H)
    mu_y = jnp.sum(hb3 * cmu, axis=-1, keepdims=True) + b_mu                     # (TB,TN,1)
    # sigma_alpha: lanes <H only (w_sigma zero-padded over the beta lanes)
    sig_a = jax.nn.softplus(jnp.sum(hb3 * wsg, axis=-1, keepdims=True) + b_sg)   # (TB,TN,1)
    # beta^2 . sigma_z^2: lanes >=H only (sigma_z^2 zero-padded over the h lanes)
    var_b = jnp.sum((hb3 * hb3) * szq, axis=-1, keepdims=True)                   # (TB,TN,1)
    sigma_y = jnp.sqrt(sig_a * sig_a + var_b)

    out_ref[...] = jnp.concatenate([mu_y, sigma_y], axis=-1)                     # (TB,TN,2)


def _largest_divisor_leq(n, limit):
    limit = int(max(1, min(n, limit)))
    for d in range(limit, 0, -1):
        if n % d == 0:
            return d
    return 1


def _choose_tiles(B, Ns, target_rows):
    # Stock tile: full Ns when it fits the row budget, else the largest multiple-of-8
    # divisor of Ns within budget (keeps block dims legal, avoids padding e).
    if Ns <= target_rows:
        tn = Ns
    else:
        tn = Ns
        d = (target_rows // 8) * 8
        while d >= 8:
            if Ns % d == 0:
                tn = d
                break
            d -= 8
    # Batch tile: a divisor of B (no jnp.pad of e) with tb*tn close to target_rows.
    tb = _largest_divisor_leq(B, max(1, target_rows // tn))
    # v7x megacore: keep >= 2 parallel grid steps when possible so both TCs get work.
    if (B // tb) * (Ns // tn) < 2 and B > 1:
        tb = _largest_divisor_leq(B, max(1, B // 2))
    return tb, tn


def factor_decoder(e, mu_z, sigma_z, params, *,
                   compute_dtype=jnp.float32, target_rows=2048):
    """e: (B, Ns, 25); mu_z, sigma_z: (B, 25). Returns (mu_y, sigma_y), each (B, Ns)."""
    B, Ns, feat = e.shape
    assert feat == H
    w1, b1, w2, b2, wsig, bsig, wb, bb = params

    # Fused [W1 | W_beta] for one MXU pass over e; fused bias likewise.
    wf = jnp.concatenate([w1, wb], axis=1).astype(compute_dtype)                  # (H, HK)
    bf = jnp.concatenate([b1, bb], axis=0).reshape(1, HK).astype(jnp.float32)     # (1, HK)

    # Tiny per-batch reduce vectors built once outside the kernel (B*HK elements):
    #   cmu[b]  = [ w_mu     | mu_z[b]        ]   -> single fused lane reduce for mu_y
    #   szsq[b] = [ 0        | sigma_z[b]**2  ]   -> beta^2 contraction
    #   wsig_p  = [ w_sigma  | 0              ]   -> sigma_alpha pre-activation
    w_mu = w2.reshape(1, H).astype(jnp.float32)
    w_sg = wsig.reshape(1, H).astype(jnp.float32)
    cmu = jnp.concatenate(
        [jnp.broadcast_to(w_mu, (B, H)), mu_z.astype(jnp.float32)], axis=1)[:, None, :]
    szsq = jnp.concatenate(
        [jnp.zeros((B, H), jnp.float32), sigma_z.astype(jnp.float32) ** 2], axis=1)[:, None, :]
    wsig_p = jnp.concatenate([w_sg, jnp.zeros((1, K), jnp.float32)], axis=1)[None, :, :]
    ab = jnp.concatenate([b2, bsig], axis=0).reshape(1, 2).astype(jnp.float32)    # (1, 2)

    TB, TN = _choose_tiles(B, Ns, target_rows)
    grid = (B // TB, Ns // TN)

    cost = pl.CostEstimate(
        flops=2 * B * Ns * H * HK + 8 * B * Ns * HK,
        transcendentals=2 * B * Ns,
        bytes_accessed=B * Ns * H * e.dtype.itemsize + B * Ns * 2 * 4
                       + (2 * B * HK + H * HK + 2 * HK + 2) * 4,
    )

    out = pl.pallas_call(
        functools.partial(factor_decoder_kernel, compute_dtype=compute_dtype),
        out_shape=jax.ShapeDtypeStruct((B, Ns, 2), jnp.float32),
        grid=grid,
        in_specs=[
            pl.BlockSpec((TB, TN, H), lambda b, n: (b, n, 0)),    # e tile
            pl.BlockSpec((TB, 1, HK), lambda b, n: (b, 0, 0)),    # [w_mu | mu_z[b]]
            pl.BlockSpec((1, 1, HK), lambda b, n: (0, 0, 0)),     # [w_sigma | 0]
            pl.BlockSpec((TB, 1, HK), lambda b, n: (b, 0, 0)),    # [0 | sigma_z[b]^2]
            pl.BlockSpec((H, HK), lambda b, n: (0, 0)),           # fused [W1 | Wb]
            pl.BlockSpec((1, HK), lambda b, n: (0, 0)),           # fused [b1 | bb]
            pl.BlockSpec((1, 2), lambda b, n: (0, 0)),            # [b_mu, b_sigma]
        ],
        out_specs=pl.BlockSpec((TB, TN, 2), lambda b, n: (b, n, 0)),
        compiler_params=pltpu.CompilerParams(
            dimension_semantics=("parallel", "parallel")),
        cost_estimate=cost,
    )(e, cmu, wsig_p, szsq, wf, bf, ab)

    # Final split (lane 0 / lane 1 of the slab) is done outside the kernel, keeping the
    # in-kernel reduce results in their natural layout (no sublane->lane relayouts).
    return out[..., 0], out[..., 1]


def reference(e, mu_z, sigma_z, params):
    """Pure-JAX mirror of the PyTorch FactorDecoder.forward for validation."""
    w1, b1, w2, b2, wsig, bsig, wb, bb = params
    h = e @ w1 + b1
    h = jnp.where(h > 0, h, 0.01 * h)
    mu_alpha = h @ w2 + b2                          # (B, Ns, 1)
    sigma_alpha = jax.nn.softplus(h @ wsig + bsig)  # (B, Ns, 1)
    beta = e @ wb + bb                              # (B, Ns, K)
    mu_y = (mu_alpha + beta @ mu_z[..., None])[..., 0]
    sigma_y = jnp.sqrt(sigma_alpha ** 2 + (beta ** 2) @ (sigma_z[..., None] ** 2))[..., 0]
    return mu_y, sigma_y


def init_params(key):
    """Deterministic parameter init (AlphaLayer(H=25), beta: Linear(25, 25))."""
    ks = jax.random.split(key, 8)
    scale = 1.0 / jnp.sqrt(float(H))
    w1 = jax.random.uniform(ks[0], (H, H), jnp.float32, -scale, scale)
    b1 = jax.random.uniform(ks[1], (H,), jnp.float32, -scale, scale)
    w2 = jax.random.uniform(ks[2], (H, 1), jnp.float32, -scale, scale)
    b2 = jax.random.uniform(ks[3], (1,), jnp.float32, -scale, scale)
    wsig = jax.random.uniform(ks[4], (H, 1), jnp.float32, -scale, scale)
    bsig = jax.random.uniform(ks[5], (1,), jnp.float32, -scale, scale)
    wb = jax.random.uniform(ks[6], (H, K), jnp.float32, -scale, scale)
    bb = jax.random.uniform(ks[7], (K,), jnp.float32, -scale, scale)
    return (w1, b1, w2, b2, wsig, bsig, wb, bb)


if __name__ == "__main__":
    key = jax.random.PRNGKey(0)
    k_e, k_mu, k_sig, k_p = jax.random.split(key, 4)
    params = init_params(k_p)

    # Test 1: small shapes consistent with the module (B=2, Ns=8, H=K=25), f32 path.
    B, Ns = 2, 8
    e = jax.random.normal(k_e, (B, Ns, H), dtype=jnp.float32)
    mu_z = jax.random.normal(k_mu, (B, K), dtype=jnp.float32)
    sigma_z = jax.nn.softplus(jax.random.normal(k_sig, (B, K), dtype=jnp.float32))

    mu_y, sigma_y = factor_decoder(e, mu_z, sigma_z, params)
    jax.block_until_ready((mu_y, sigma_y))
    mu_ref, sigma_ref = reference(e, mu_z, sigma_z, params)
    assert mu_y.shape == (B, Ns) and sigma_y.shape == (B, Ns)
    assert jnp.allclose(mu_y, mu_ref, rtol=1e-4, atol=1e-4)
    assert jnp.allclose(sigma_y, sigma_ref, rtol=1e-4, atol=1e-4)

    # Test 2: multi-step grid over both batch tiles and stock tiles (no padding).
    B2, Ns2 = 10, 16
    e2 = jax.random.normal(jax.random.PRNGKey(1), (B2, Ns2, H), dtype=jnp.float32)
    mu_z2 = jax.random.normal(jax.random.PRNGKey(2), (B2, K), dtype=jnp.float32)
    sigma_z2 = jax.nn.softplus(
        jax.random.normal(jax.random.PRNGKey(3), (B2, K), dtype=jnp.float32))
    mu_y2, sigma_y2 = factor_decoder(e2, mu_z2, sigma_z2, params, target_rows=8)
    jax.block_until_ready((mu_y2, sigma_y2))
    mu_ref2, sigma_ref2 = reference(e2, mu_z2, sigma_z2, params)
    assert jnp.allclose(mu_y2, mu_ref2, rtol=1e-4, atol=1e-4)
    assert jnp.allclose(sigma_y2, sigma_ref2, rtol=1e-4, atol=1e-4)

    # Test 3: bf16 MXU path (v6e/v7x-friendly); looser tolerance is expected bf16 loss.
    mu_yb, sigma_yb = factor_decoder(e, mu_z, sigma_z, params, compute_dtype=jnp.bfloat16)
    jax.block_until_ready((mu_yb, sigma_yb))
    assert jnp.allclose(mu_yb, mu_ref, rtol=1e-1, atol=1e-1)
    assert jnp.allclose(sigma_yb, sigma_ref, rtol=1e-1, atol=1e-1)

    print("KERNEL_OK")
</pallas_src>

<mosaic_0001>
module attributes {stable_mosaic.version = 11 : i64} {
  func.func @factor_decoder_kernel(%arg0: i32, %arg1: i32, %arg2: memref<1x8x25xf32, #tpu.memory_space<vmem>>, %arg3: memref<1x1x50xf32, #tpu.memory_space<vmem>>, %arg4: memref<1x1x50xf32, #tpu.memory_space<vmem>>, %arg5: memref<1x1x50xf32, #tpu.memory_space<vmem>>, %arg6: memref<25x50xf32, #tpu.memory_space<vmem>>, %arg7: memref<1x50xf32, #tpu.memory_space<vmem>>, %arg8: memref<1x2xf32, #tpu.memory_space<vmem>>, %arg9: memref<1x8x2xf32, #tpu.memory_space<vmem>>) attributes {dimension_semantics = [#tpu.dimension_semantics<parallel>, #tpu.dimension_semantics<parallel>], iteration_bounds = array<i64: 2, 1>, scalar_prefetch = 0 : i64, scratch_operands = 0 : i64, tpu.core_type = #tpu.core_type<tc>, window_params = [{transform_indices = @transform_0, window_bounds = array<i64: 1, 8, 25>}, {transform_indices = @transform_1, window_bounds = array<i64: 1, 1, 50>}, {pipeline_mode = #tpu.pipeline_mode<synchronous>, transform_indices = @transform_2, window_bounds = array<i64: 1, 1, 50>}, {transform_indices = @transform_3, window_bounds = array<i64: 1, 1, 50>}, {pipeline_mode = #tpu.pipeline_mode<synchronous>, transform_indices = @transform_4, window_bounds = array<i64: 25, 50>}, {pipeline_mode = #tpu.pipeline_mode<synchronous>, transform_indices = @transform_5, window_bounds = array<i64: 1, 50>}, {pipeline_mode = #tpu.pipeline_mode<synchronous>, transform_indices = @transform_6, window_bounds = array<i64: 1, 2>}, {transform_indices = @transform_7, window_bounds = array<i64: 1, 8, 2>}]} {
    %c0 = arith.constant 0 : index
    %c0_0 = arith.constant 0 : index
    %c0_1 = arith.constant 0 : index
    %0 = vector.load %arg2[%c0, %c0_0, %c0_1] : memref<1x8x25xf32, #tpu.memory_space<vmem>>, vector<1x8x25xf32>
    %1 = vector.shape_cast %0 : vector<1x8x25xf32> to vector<8x25xf32>
    %c0_2 = arith.constant 0 : index
    %c0_3 = arith.constant 0 : index
    %2 = vector.load %arg6[%c0_2, %c0_3] : memref<25x50xf32, #tpu.memory_space<vmem>>, vector<25x50xf32>
    %cst = arith.constant dense<0.000000e+00> : vector<8x50xf32>
    %3 = tpu.matmul %1, %2, %cst {dimension_numbers = #tpu.dot_dimension_numbers<[1], [0], [0], [1], [0, 0, 1, 1], [], []>} : vector<8x25xf32>, vector<25x50xf32>, vector<8x50xf32> -> vector<8x50xf32>
    %c0_4 = arith.constant 0 : index
    %c0_5 = arith.constant 0 : index
    %4 = vector.load %arg7[%c0_4, %c0_5] : memref<1x50xf32, #tpu.memory_space<vmem>>, vector<1x50xf32>
    %5 = vector.broadcast %4 : vector<1x50xf32> to vector<8x50xf32>
    %6 = arith.addf %3, %5 : vector<8x50xf32>
    %7 = tpu.iota {dimensions = array<i32: 1>} : vector<8x50xi32>
    %c25_i32 = arith.constant 25 : i32
    %8 = vector.broadcast %c25_i32 : i32 to vector<8x50xi32>
    %9 = arith.cmpi sge, %7, %8 : vector<8x50xi32>
    %cst_6 = arith.constant 0.000000e+00 : f32
    %10 = vector.broadcast %cst_6 : f32 to vector<8x50xf32>
    %11 = arith.cmpf ogt, %6, %10 : vector<8x50xf32>
    %12 = arith.ori %9, %11 : vector<8x50xi1>
    %cst_7 = arith.constant 0.00999999977 : f32
    %13 = vector.broadcast %cst_7 : f32 to vector<8x50xf32>
    %14 = arith.mulf %13, %6 : vector<8x50xf32>
    %15 = arith.select %12, %6, %14 : vector<8x50xi1>, vector<8x50xf32>
    %16 = vector.shape_cast %15 : vector<8x50xf32> to vector<1x8x50xf32>
    %c0_8 = arith.constant 0 : index
    %c0_9 = arith.constant 0 : index
    %c0_10 = arith.constant 0 : index
    %17 = vector.load %arg3[%c0_8, %c0_9, %c0_10] : memref<1x1x50xf32, #tpu.memory_space<vmem>>, vector<1x1x50xf32>
    %c0_11 = arith.constant 0 : index
    %c0_12 = arith.constant 0 : index
    %c0_13 = arith.constant 0 : index
    %18 = vector.load %arg4[%c0_11, %c0_12, %c0_13] : memref<1x1x50xf32, #tpu.memory_space<vmem>>, vector<1x1x50xf32>
    %c0_14 = arith.constant 0 : index
    %c0_15 = arith.constant 0 : index
    %c0_16 = arith.constant 0 : index
    %19 = vector.load %arg5[%c0_14, %c0_15, %c0_16] : memref<1x1x50xf32, #tpu.memory_space<vmem>>, vector<1x1x50xf32>
    %c0_17 = arith.constant 0 : index
    %c0_18 = arith.constant 0 : index
    %20 = vector.load %arg8[%c0_17, %c0_18] : memref<1x2xf32, #tpu.memory_space<vmem>>, vector<1x2xf32>
    %21 = vector.extract_strided_slice %20 {offsets = [0, 0], sizes = [1, 1], strides = [1, 1]} : vector<1x2xf32> to vector<1x1xf32>
    %22 = vector.extract_strided_slice %20 {offsets = [0, 1], sizes = [1, 1], strides = [1, 1]} : vector<1x2xf32> to vector<1x1xf32>
    %23 = vector.broadcast %17 : vector<1x1x50xf32> to vector<1x8x50xf32>
    %24 = arith.mulf %16, %23 : vector<1x8x50xf32>
    %cst_19 = arith.constant dense<0.000000e+00> : vector<1x8xf32>
    %25 = vector.multi_reduction <add>, %24, %cst_19 [2] : vector<1x8x50xf32> to vector<1x8xf32>
    %26 = vector.shape_cast %25 : vector<1x8xf32> to vector<1x8x1xf32>
    %27 = vector.shape_cast %21 : vector<1x1xf32> to vector<1x1x1xf32>
    %28 = vector.broadcast %27 : vector<1x1x1xf32> to vector<1x8x1xf32>
    %29 = arith.addf %26, %28 : vector<1x8x1xf32>
    %30 = vector.broadcast %18 : vector<1x1x50xf32> to vector<1x8x50xf32>
    %31 = arith.mulf %16, %30 : vector<1x8x50xf32>
    %cst_20 = arith.constant dense<0.000000e+00> : vector<1x8xf32>
    %32 = vector.multi_reduction <add>, %31, %cst_20 [2] : vector<1x8x50xf32> to vector<1x8xf32>
    %33 = vector.shape_cast %32 : vector<1x8xf32> to vector<1x8x1xf32>
    %34 = vector.shape_cast %22 : vector<1x1xf32> to vector<1x1x1xf32>
    %35 = vector.broadcast %34 : vector<1x1x1xf32> to vector<1x8x1xf32>
    %36 = arith.addf %33, %35 : vector<1x8x1xf32>
    %cst_21 = arith.constant 0.000000e+00 : f32
    %37 = vector.broadcast %cst_21 : f32 to vector<1x8x1xf32>
    %38 = arith.maximumf %36, %37 : vector<1x8x1xf32>
    %39 = vector.broadcast %cst_21 : f32 to vector<1x8x1xf32>
    %40 = arith.subf %36, %39 : vector<1x8x1xf32>
    %41 = arith.cmpf one, %40, %40 : vector<1x8x1xf32>
    %42 = vector.broadcast %cst_21 : f32 to vector<1x8x1xf32>
    %43 = arith.addf %36, %42 : vector<1x8x1xf32>
    %44 = math.absf %40 : vector<1x8x1xf32>
    %cst_22 = arith.constant 0.000000e+00 : f32
    %45 = vector.broadcast %cst_22 : f32 to vector<1x8x1xf32>
    %46 = arith.subf %45, %44 : vector<1x8x1xf32>
    %47 = math.exp %46 : vector<1x8x1xf32>
    %48 = math.log1p %47 : vector<1x8x1xf32>
    %49 = arith.addf %38, %48 : vector<1x8x1xf32>
    %50 = arith.select %41, %43, %49 : vector<1x8x1xi1>, vector<1x8x1xf32>
    %51 = arith.mulf %16, %16 : vector<1x8x50xf32>
    %52 = vector.broadcast %19 : vector<1x1x50xf32> to vector<1x8x50xf32>
    %53 = arith.mulf %51, %52 : vector<1x8x50xf32>
    %cst_23 = arith.constant dense<0.000000e+00> : vector<1x8xf32>
    %54 = vector.multi_reduction <add>, %53, %cst_23 [2] : vector<1x8x50xf32> to vector<1x8xf32>
    %55 = vector.shape_cast %54 : vector<1x8xf32> to vector<1x8x1xf32>
    %56 = arith.mulf %50, %50 : vector<1x8x1xf32>
    %57 = arith.addf %56, %55 : vector<1x8x1xf32>
    %58 = math.sqrt %57 : vector<1x8x1xf32>
    %59 = tpu.concatenate %29, %58 in 2 : vector<1x8x1xf32>, vector<1x8x1xf32> -> vector<1x8x2xf32>
    %c0_24 = arith.constant 0 : index
    %c0_25 = arith.constant 0 : index
    %c0_26 = arith.constant 0 : index
    %60 = vector.load %arg9[%c0_24, %c0_25, %c0_26] : memref<1x8x2xf32, #tpu.memory_space<vmem>>, vector<1x8x2xf32>
    tpu.vector_store %arg9[%c0_24, %c0_25, %c0_26], %59 {strides = array<i32>} : memref<1x8x2xf32, #tpu.memory_space<vmem>>, vector<1x8x2xf32>,
    return
  }
  func.func @transform_0(%arg0: i32, %arg1: i32) -> (i32, i32, i32) {
    %c0_i32 = arith.constant 0 : i32
    %c0_i32_0 = arith.constant 0 : i32
    return %arg0, %arg1, %c0_i32 : i32, i32, i32
  }
  func.func @transform_1(%arg0: i32, %arg1: i32) -> (i32, i32, i32) {
    %c0_i32 = arith.constant 0 : i32
    %c0_i32_0 = arith.constant 0 : i32
    %c0_i32_1 = arith.constant 0 : i32
    return %arg0, %c0_i32, %c0_i32_0 : i32, i32, i32
  }
  func.func @transform_2(%arg0: i32, %arg1: i32) -> (i32, i32, i32) {
    %c0_i32 = arith.constant 0 : i32
    %c0_i32_0 = arith.constant 0 : i32
    %c0_i32_1 = arith.constant 0 : i32
    %c0_i32_2 = arith.constant 0 : i32
    return %c0_i32, %c0_i32_0, %c0_i32_1 : i32, i32, i32
  }
  func.func @transform_3(%arg0: i32, %arg1: i32) -> (i32, i32, i32) {
    %c0_i32 = arith.constant 0 : i32
    %c0_i32_0 = arith.constant 0 : i32
    %c0_i32_1 = arith.constant 0 : i32
    return %arg0, %c0_i32, %c0_i32_0 : i32, i32, i32
  }
  func.func @transform_4(%arg0: i32, %arg1: i32) -> (i32, i32) {
    %c0_i32 = arith.constant 0 : i32
    %c0_i32_0 = arith.constant 0 : i32
    %c0_i32_1 = arith.constant 0 : i32
    return %c0_i32, %c0_i32_0 : i32, i32
  }
  func.func @transform_5(%arg0: i32, %arg1: i32) -> (i32, i32) {
    %c0_i32 = arith.constant 0 : i32
    %c0_i32_0 = arith.constant 0 : i32
    %c0_i32_1 = arith.constant 0 : i32
    return %c0_i32, %c0_i32_0 : i32, i32
  }
  func.func @transform_6(%arg0: i32, %arg1: i32) -> (i32, i32) {
    %c0_i32 = arith.constant 0 : i32
    %c0_i32_0 = arith.constant 0 : i32
    %c0_i32_1 = arith.constant 0 : i32
    return %c0_i32, %c0_i32_0 : i32, i32
  }
  func.func @transform_7(%arg0: i32, %arg1: i32) -> (i32, i32, i32) {
    %c0_i32 = arith.constant 0 : i32
    %c0_i32_0 = arith.constant 0 : i32
    return %arg0, %arg1, %c0_i32 : i32, i32, i32
  }
}

</mosaic_0001>

<llo_original>
// kernel: tpu_custom_call.1
$region0: #{tpu_custom_call.1}
  #allocation0 [shape = 'u32[]', space=smem, size = 0x4, offset = 0x4, fixed_abs, tag = 'smem constant byte address 0x4 - core index']
  #allocation1 [shape = 'u32[144,128]{1,0:T(1,128)}', space=vmem, size = 0x12000, scoped, tag = 'internal scratch']
  %s0 = inlined_call_operand.hbm [shape: f32[2,8,25], index: 0, kind: input, shape index: {}]
  %s1 = inlined_call_operand.vmem [shape: f32[2,1,50], index: 1, kind: input, shape index: {}]
  %s2 = inlined_call_operand.vmem [shape: f32[1,1,50], index: 2, kind: input, shape index: {}]
  %s3 = inlined_call_operand.vmem [shape: f32[2,1,50], index: 3, kind: input, shape index: {}]
  %s4 = inlined_call_operand.hbm [shape: f32[25,50], index: 4, kind: input, shape index: {}]
  %s5 = inlined_call_operand.vmem [shape: f32[1,50], index: 5, kind: input, shape index: {}]
  %s6 = inlined_call_operand.vmem [shape: f32[1,2], index: 6, kind: input, shape index: {}]
  %s7 = inlined_call_operand.vmem [shape: f32[2,8,2], index: 7, kind: output, shape index: {}]
  %s8 = sld [smem:[#allocation0]]
  $region69: #{tpu_custom_call.1} parent=0
    _
  %s10 = ssub.s32 1, %s8
  %s11 = scalar_select 0, %s10, %s8
  $region1: #{tpu_custom_call.1} parent=0
    #allocation2 [shape = 'u8[8192]{0}', space=vmem, size = 0x2000, scoped, tag = 'input window, operand 0']
    #allocation3 [shape = 's32[2]{0}', space=sflag, size = 0x8, scoped, tag = 'scoped memory for tpu_custom_call.1']
    #allocation4 [shape = 'u8[16384]{0}', space=vmem, size = 0x4000, scoped, tag = 'input window, operand 4, single buffered']
    #allocation5 [shape = 's32[1]{0}', space=sflag, size = 0x4, scoped, tag = 'scoped memory for tpu_custom_call.1']
    %12 = vsyncpa [#allocation3], 0
    %s13 = scalar_lea.sflag [#allocation3], 1
    %14 = vsyncpa %s13, 0
    %15 = vsyncpa [#allocation5], 0
    loop: start=0, step=1, limit=4
    $region2: #{tpu_custom_call.1} parent=1 // loop_pre_header
      _
    $region3: #{tpu_custom_call.1} parent=1 // loop_header
      %s17 = sphi 0, %s21
      %p18 = scmp.ge.s32.totalorder %s17, 4
      %s24 = sphi 0, %s36
      %s25 = sphi 0, %s32
      %s26 = sphi 0, %s24
      %s27 = sphi 0, %s25
      %s28 = sphi 0, %s26
      %s29 = sphi 0, %s27
      %s41 = sphi 0, %s43
      %s44 = sphi 0, %s41
      %s45 = sphi 0, %s44
      %s61 = sphi 0, %s45
      %s67 = sphi 0, %s69
      %s70 = sphi 0, %s67
      %s71 = sphi 0, %s70
      %s87 = sphi 0, %s71
      %s91 = sphi 0, %s91
      %s93 = sphi 0, %s91
      %s94 = sphi 0, %s93
      %s108 = sphi 0, %s94
      %s114 = sphi 0, %s116
      %s117 = sphi 0, %s114
      %s118 = sphi 0, %s117
      %s134 = sphi 0, %s118
      %s138 = sphi 0, %s138
      %s140 = sphi 0, %s138
      %s141 = sphi 0, %s140
      %s155 = sphi 0, %s141
      %s159 = sphi 0, %s159
      %s161 = sphi 0, %s159
      %s162 = sphi 0, %s161
      %s176 = sphi 0, %s162
      %s180 = sphi 0, %s180
      %s182 = sphi 0, %s180
      %s183 = sphi 0, %s182
      %s197 = sphi 0, %s183
      %s205 = sphi 0, %s207
      %s208 = sphi 0, %s205
      %s209 = sphi 0, %s208
      %s225 = sphi 0, %s209
    $region4: #{tpu_custom_call.1} parent=1 // loop_header_branch
      %20 = sbr.rel (%p18) target = $region8
    $region5: #{tpu_custom_call.1} parent=1 // loop_body
      %s22 = ssub.s32 %s17, 1
      %s23 = ssub.s32 %s17, 2
      %s30 = sadd.s32 1, %s25
      %p31 = scmp.ge.s32.totalorder %s30, 1
      %s32 = scalar_select %p31, 0, %s30
      %s33 = sadd.s32 1, %s24
      %s34 = scalar_select %p31, %s33, %s24
      %p35 = scmp.ge.s32.totalorder %s34, 2
      %s36 = scalar_select %p35, 0, %s34
      %s37 = ssub.s32 %s24, %s36
      %s38 = ssub.s32 %s25, %s32
      %s39 = sor.u32 %s37, %s38
      %p40 = scmp.eq.s32.totalorder %s39, 0
      %s42 = sadd.s32 %s41, 1
      %s43 = scalar_select %p40, %s41, %s42
      %p46 = pneg %p40
      %p47 = scmp.eq.s32.totalorder %s17, 1
      %p48 = por %p46, %p47
      %p49 = scmp.ne.s32.totalorder %s41, %s44
      %p50 = scmp.eq.s32.totalorder %s17, 0
      %p51 = por %p49, %p50
      %p52 = scmp.ne.s32.totalorder %s41, %s44
      %p53 = scmp.eq.s32.totalorder %s22, 1
      %p54 = por %p52, %p53
      %p55 = scmp.ne.s32.totalorder %s44, %s45
      %p56 = scmp.eq.s32.totalorder %s22, 0
      %p57 = por %p55, %p56
      %p58 = scmp.ne.s32.totalorder %s44, %s45
      %p59 = scmp.eq.s32.totalorder %s23, 1
      %p60 = por %p58, %p59
      %p62 = scmp.ne.s32.totalorder %s45, %s61
      %p63 = scmp.eq.s32.totalorder %s23, 0
      %p64 = por %p62, %p63
      %s65 = ssub.s32 %s24, %s36
      %p66 = scmp.eq.s32.totalorder %s65, 0
      %s68 = sadd.s32 %s67, 1
      %s69 = scalar_select %p66, %s67, %s68
      %p72 = pneg %p66
      %p73 = scmp.eq.s32.totalorder %s17, 1
      %p74 = por %p72, %p73
      %p75 = scmp.ne.s32.totalorder %s67, %s70
      %p76 = scmp.eq.s32.totalorder %s17, 0
      %p77 = por %p75, %p76
      %p78 = scmp.ne.s32.totalorder %s67, %s70
      %p79 = scmp.eq.s32.totalorder %s22, 1
      %p80 = por %p78, %p79
      %p81 = scmp.ne.s32.totalorder %s70, %s71
      %p82 = scmp.eq.s32.totalorder %s22, 0
      %p83 = por %p81, %p82
      %p84 = scmp.ne.s32.totalorder %s70, %s71
      %p85 = scmp.eq.s32.totalorder %s23, 1
      %p86 = por %p84, %p85
      %p88 = scmp.ne.s32.totalorder %s71, %s87
      %p89 = scmp.eq.s32.totalorder %s23, 0
      %p90 = por %p88, %p89
      %s92 = sadd.s32 %s91, 1
      %p95 = scmp.eq.s32.totalorder %s17, 1
      %p96 = scmp.ne.s32.totalorder %s91, %s93
      %p97 = scmp.eq.s32.totalorder %s17, 0
      %p98 = por %p96, %p97
      %p99 = scmp.ne.s32.totalorder %s91, %s93
      %p100 = scmp.eq.s32.totalorder %s22, 1
      %p101 = por %p99, %p100
      %p102 = scmp.ne.s32.totalorder %s93, %s94
      %p103 = scmp.eq.s32.totalorder %s22, 0
      %p104 = por %p102, %p103
      %p105 = scmp.ne.s32.totalorder %s93, %s94
      %p106 = scmp.eq.s32.totalorder %s23, 1
      %p107 = por %p105, %p106
      %p109 = scmp.ne.s32.totalorder %s94, %s108
      %p110 = scmp.eq.s32.totalorder %s23, 0
      %p111 = por %p109, %p110
      %s112 = ssub.s32 %s24, %s36
      %p113 = scmp.eq.s32.totalorder %s112, 0
      %s115 = sadd.s32 %s114, 1
      %s116 = scalar_select %p113, %s114, %s115
      %p119 = pneg %p113
      %p120 = scmp.eq.s32.totalorder %s17, 1
      %p121 = por %p119, %p120
      %p122 = scmp.ne.s32.totalorder %s114, %s117
      %p123 = scmp.eq.s32.totalorder %s17, 0
      %p124 = por %p122, %p123
      %p125 = scmp.ne.s32.totalorder %s114, %s117
      %p126 = scmp.eq.s32.totalorder %s22, 1
      %p127 = por %p125, %p126
      %p128 = scmp.ne.s32.totalorder %s117, %s118
      %p129 = scmp.eq.s32.totalorder %s22, 0
      %p130 = por %p128, %p129
      %p131 = scmp.ne.s32.totalorder %s117, %s118
      %p132 = scmp.eq.s32.totalorder %s23, 1
      %p133 = por %p131, %p132
      %p135 = scmp.ne.s32.totalorder %s118, %s134
      %p136 = scmp.eq.s32.totalorder %s23, 0
      %p137 = por %p135, %p136
      %s139 = sadd.s32 %s138, 1
      %p142 = scmp.eq.s32.totalorder %s17, 1
      %p143 = scmp.ne.s32.totalorder %s138, %s140
      %p144 = scmp.eq.s32.totalorder %s17, 0
      %p145 = por %p143, %p144
      %p146 = scmp.ne.s32.totalorder %s138, %s140
      %p147 = scmp.eq.s32.totalorder %s22, 1
      %p148 = por %p146, %p147
      %p149 = scmp.ne.s32.totalorder %s140, %s141
      %p150 = scmp.eq.s32.totalorder %s22, 0
      %p151 = por %p149, %p150
      %p152 = scmp.ne.s32.totalorder %s140, %s141
      %p153 = scmp.eq.s32.totalorder %s23, 1
      %p154 = por %p152, %p153
      %p156 = scmp.ne.s32.totalorder %s141, %s155
      %p157 = scmp.eq.s32.totalorder %s23, 0
      %p158 = por %p156, %p157
      %s160 = sadd.s32 %s159, 1
      %p163 = scmp.eq.s32.totalorder %s17, 1
      %p164 = scmp.ne.s32.totalorder %s159, %s161
      %p165 = scmp.eq.s32.totalorder %s17, 0
      %p166 = por %p164, %p165
      %p167 = scmp.ne.s32.totalorder %s159, %s161
      %p168 = scmp.eq.s32.totalorder %s22, 1
      %p169 = por %p167, %p168
      %p170 = scmp.ne.s32.totalorder %s161, %s162
      %p171 = scmp.eq.s32.totalorder %s22, 0
      %p172 = por %p170, %p171
      %p173 = scmp.ne.s32.totalorder %s161, %s162
      %p174 = scmp.eq.s32.totalorder %s23, 1
      %p175 = por %p173, %p174
      %p177 = scmp.ne.s32.totalorder %s162, %s176
      %p178 = scmp.eq.s32.totalorder %s23, 0
      %p179 = por %p177, %p178
      %s181 = sadd.s32 %s180, 1
      %p184 = scmp.eq.s32.totalorder %s17, 1
      %p185 = scmp.ne.s32.totalorder %s180, %s182
      %p186 = scmp.eq.s32.totalorder %s17, 0
      %p187 = por %p185, %p186
      %p188 = scmp.ne.s32.totalorder %s180, %s182
      %p189 = scmp.eq.s32.totalorder %s22, 1
      %p190 = por %p188, %p189
      %p191 = scmp.ne.s32.totalorder %s182, %s183
      %p192 = scmp.eq.s32.totalorder %s22, 0
      %p193 = por %p191, %p192
      %p194 = scmp.ne.s32.totalorder %s182, %s183
      %p195 = scmp.eq.s32.totalorder %s23, 1
      %p196 = por %p194, %p195
      %p198 = scmp.ne.s32.totalorder %s183, %s197
      %p199 = scmp.eq.s32.totalorder %s23, 0
      %p200 = por %p198, %p199
      %s201 = ssub.s32 %s24, %s36
      %s202 = ssub.s32 %s25, %s32
      %s203 = sor.u32 %s201, %s202
      %p204 = scmp.eq.s32.totalorder %s203, 0
      %s206 = sadd.s32 %s205, 1
      %s207 = scalar_select %p204, %s205, %s206
      %p210 = pneg %p204
      %p211 = scmp.eq.s32.totalorder %s17, 1
      %p212 = por %p210, %p211
      %p213 = scmp.ne.s32.totalorder %s205, %s208
      %p214 = scmp.eq.s32.totalorder %s17, 0
      %p215 = por %p213, %p214
      %p216 = scmp.ne.s32.totalorder %s205, %s208
      %p217 = scmp.eq.s32.totalorder %s22, 1
      %p218 = por %p216, %p217
      %p219 = scmp.ne.s32.totalorder %s208, %s209
      %p220 = scmp.eq.s32.totalorder %s22, 0
      %p221 = por %p219, %p220
      %p222 = scmp.ne.s32.totalorder %s208, %s209
      %p223 = scmp.eq.s32.totalorder %s23, 1
      %p224 = por %p222, %p223
      %p226 = scmp.ne.s32.totalorder %s209, %s225
      %p227 = scmp.eq.s32.totalorder %s23, 0
      %p228 = por %p226, %p227
      %p229 = scmp.le.s32.totalorder 1, %s17
      %p230 = scmp.lt.s32.totalorder %s17, 3
      %p231 = pnand %p229, %p230
      %p232 = pneg %p231
      // Predicated region
      $region9: #{tpu_custom_call.1} parent=5 // pred_check
        _
      $region10: #{tpu_custom_call.1} parent=5 // pred_check_branch
        %234 = sbr.rel (%p231) target = $region12
      $region11: #{tpu_custom_call.1} parent=5 // pred_region
        %s235 = ssub.s32 %s17, 1
        // Predicated region
        $region13: #{tpu_custom_call.1} parent=11 // pred_check
          %p236 = pneg %p104
        $region14: #{tpu_custom_call.1} parent=11 // pred_check_branch
          %238 = sbr.rel (%p236) target = $region16
        $region15: #{tpu_custom_call.1} parent=11 // pred_region
          _
        $region16: #{tpu_custom_call.1} parent=11 // pred_fallthru
          _
        // Predicated region
        $region17: #{tpu_custom_call.1} parent=11 // pred_check
          %p239 = pneg %p151
        $region18: #{tpu_custom_call.1} parent=11 // pred_check_branch
          %241 = sbr.rel (%p239) target = $region20
        $region19: #{tpu_custom_call.1} parent=11 // pred_region
          %s243 = ssub.s32 512, 512
          %244 = vsyncadd [#allocation5], %s243
          %s245 = sshll.u32 [#allocation4], 4
          %s246 = int_to_ptr.vmem [resolvable:$true] %s245
          %251 = dma.hbm_to_vmem [thread:$0]  %s4, 512, %s246, [#allocation5], 128, 128, 8
        $region20: #{tpu_custom_call.1} parent=11 // pred_fallthru
          _
        // Predicated region
        $region21: #{tpu_custom_call.1} parent=11 // pred_check
          %p252 = pneg %p172
        $region22: #{tpu_custom_call.1} parent=11 // pred_check_branch
          %254 = sbr.rel (%p252) target = $region24
        $region23: #{tpu_custom_call.1} parent=11 // pred_region
          _
        $region24: #{tpu_custom_call.1} parent=11 // pred_fallthru
          _
        // Predicated region
        $region25: #{tpu_custom_call.1} parent=11 // pred_check
          %p255 = pneg %p193
        $region26: #{tpu_custom_call.1} parent=11 // pred_check_branch
          %257 = sbr.rel (%p255) target = $region28
        $region27: #{tpu_custom_call.1} parent=11 // pred_region
          _
        $region28: #{tpu_custom_call.1} parent=11 // pred_fallthru
          _
      $region12: #{tpu_custom_call.1} parent=5 // pred_fallthru
        _
      %p258 = scmp.lt.s32.totalorder %s17, 2
      // Predicated region
      $region29: #{tpu_custom_call.1} parent=5 // pred_check
        %p259 = pneg %p258
      $region30: #{tpu_custom_call.1} parent=5 // pred_check_branch
        %261 = sbr.rel (%p259) target = $region32
      $region31: #{tpu_custom_call.1} parent=5 // pred_region
        // Predicated region
        $region33: #{tpu_custom_call.1} parent=31 // pred_check
          %p262 = pneg %p51
        $region34: #{tpu_custom_call.1} parent=31 // pred_check_branch
          %264 = sbr.rel (%p262) target = $region36
        $region35: #{tpu_custom_call.1} parent=31 // pred_region
          %s265 = sand.u32 %s41, 1
          %s266 = scalar_lea.sflag [#allocation3], %s265
          %s267 = sand.u32 %s41, 1
          %s268 = smul.addr %s267, 8
          %s269 = scalar_lea.vmem [#allocation2], %s268
          %s271 = ssub.s32 128, 128
          %272 = vsyncadd %s266, %s271
          %s273 = sadd.s32 %s25, %s24
          %s274 = smul.addr %s273, 128
          %s275 = scalar_lea.hbm %s0, %s274
          %s277 = sshll.u32 %s269, 4
          %s278 = int_to_ptr.vmem [resolvable:$true] %s277
          %280 = dma.hbm_to_vmem [thread:$0]  %s275, 128, %s278, %s266
        $region36: #{tpu_custom_call.1} parent=31 // pred_fallthru
          _
        // Predicated region
        $region37: #{tpu_custom_call.1} parent=31 // pred_check
          %p281 = pneg %p77
        $region38: #{tpu_custom_call.1} parent=31 // pred_check_branch
          %283 = sbr.rel (%p281) target = $region40
        $region39: #{tpu_custom_call.1} parent=31 // pred_region
          %p284 = scmp.lt.s32.totalorder %s24, 1
          %s285 = scalar_select %p284, %s24, 1
          %s286 = scalar_lea.vmem %s1, %s285
        $region40: #{tpu_custom_call.1} parent=31 // pred_fallthru
          _
        // Predicated region
        $region41: #{tpu_custom_call.1} parent=31 // pred_check
          %p287 = pneg %p124
        $region42: #{tpu_custom_call.1} parent=31 // pred_check_branch
          %289 = sbr.rel (%p287) target = $region44
        $region43: #{tpu_custom_call.1} parent=31 // pred_region
          %p290 = scmp.lt.s32.totalorder %s24, 1
          %s291 = scalar_select %p290, %s24, 1
          %s292 = scalar_lea.vmem %s3, %s291
        $region44: #{tpu_custom_call.1} parent=31 // pred_fallthru
          _
      $region32: #{tpu_custom_call.1} parent=5 // pred_fallthru
        _
      %p293 = scmp.le.s32.totalorder 1, %s17
      %p294 = scmp.lt.s32.totalorder %s17, 3
      %p295 = pnand %p293, %p294
      %p296 = pneg %p295
      // Predicated region
      $region45: #{tpu_custom_call.1} parent=5 // pred_check
        _
      $region46: #{tpu_custom_call.1} parent=5 // pred_check_branch
        %298 = sbr.rel (%p295) target = $region48
      $region47: #{tpu_custom_call.1} parent=5 // pred_region
        %s299 = ssub.s32 %s17, 1
        %s300 = sand.u32 %s44, 1
        %s301 = scalar_lea.sflag [#allocation3], %s300
        %s302 = sand.u32 %s44, 1
        %s303 = smul.addr %s302, 8
        %s304 = scalar_lea.vmem [#allocation2], %s303
        // Predicated region
        $region49: #{tpu_custom_call.1} parent=47 // pred_check
          %p305 = pneg %p57
        $region50: #{tpu_custom_call.1} parent=47 // pred_check_branch
          %307 = sbr.rel (%p305) target = $region52
        $region51: #{tpu_custom_call.1} parent=47 // pred_region
          %308 = dma.done %s301, 128
        $region52: #{tpu_custom_call.1} parent=47 // pred_fallthru
          _
        // Predicated region
        $region53: #{tpu_custom_call.1} parent=47 // pred_check
          %p309 = pneg %p151
        $region54: #{tpu_custom_call.1} parent=47 // pred_check_branch
          %311 = sbr.rel (%p309) target = $region56
        $region55: #{tpu_custom_call.1} parent=47 // pred_region
          %312 = dma.done [#allocation5], 512
        $region56: #{tpu_custom_call.1} parent=47 // pred_fallthru
          _
        %s313 = sand.u32 %s44, 1
        %s314 = scalar_lea.sflag [#allocation3], %s313
        %s315 = sand.u32 %s44, 1
        %s316 = smul.addr %s315, 8
        %s317 = scalar_lea.vmem [#allocation2], %s316
        %p318 = pneg %p57
        %p319 = pneg %p54
        %p320 = scmp.lt.s32.totalorder %s26, 1
        %s321 = scalar_select %p320, %s26, 1
        %s322 = scalar_lea.vmem %s1, %s321
        %p323 = pneg %p83
        %p324 = pneg %p80
        %p325 = pneg %p104
        %p326 = pneg %p101
        %p327 = scmp.lt.s32.totalorder %s26, 1
        %s328 = scalar_select %p327, %s26, 1
        %s329 = scalar_lea.vmem %s3, %s328
        %p330 = pneg %p130
        %p331 = pneg %p127
        %p332 = pneg %p151
        %p333 = pneg %p148
        %p334 = pneg %p172
        %p335 = pneg %p169
        %p336 = pneg %p193
        %p337 = pneg %p190
        %p338 = pneg %p221
        %p339 = pneg %p218
        %p340 = scmp.lt.s32.totalorder %s26, 1
        %s341 = scalar_select %p340, %s26, 1
        %p342 = scmp.lt.s32.totalorder %s27, 0
        %s343 = scalar_select %p342, %s27, 0
        %s344 = sadd.s32 %s343, %s341
        %s345 = smul.addr %s344, 8
        %s346 = scalar_lea.vmem %s7, %s345
        %p347 = scmp.lt.s32.totalorder %s26, 1
        %s348 = scalar_select %p347, %s26, 1
        %s349 = scalar_lea.vmem %s1, %s348
        %p350 = scmp.lt.s32.totalorder %s26, 1
        %s351 = scalar_select %p350, %s26, 1
        %s352 = scalar_lea.vmem %s3, %s351
        %p353 = scmp.lt.s32.totalorder %s26, 1
        %s354 = scalar_select %p353, %s26, 1
        %p355 = scmp.lt.s32.totalorder %s27, 0
        %s356 = scalar_select %p355, %s27, 0
        %s357 = sadd.s32 %s356, %s354
        %s358 = smul.addr %s357, 8
        %s359 = scalar_lea.vmem %s7, %s358
        %v360 = vld [vmem:[%s304] sm:$0xff]
        %v361 = vld [vmem:[#allocation4] sm:$0xff]
        %v362 = vld [vmem:[#allocation4 + $0x8] sm:$0xff]
        %v363 = vld [vmem:[#allocation4 + $0x10] sm:$0xff]
        %v364 = vld [vmem:[#allocation4 + $0x18] sm:$0x1]
        %v365 = vld [vmem:[%s5] sm:$0x1]
        %v367 = vlaneseq
        %v368 = vshrl.u32 %v367, 7
        %v369 = vsub.s32 0, %v368
        %v370 = vrot.slane %v365, %v369
        %vm372 = vcmask 203776
        %v374 = vsel %vm372, %v360, 0
        %vm376 = vcmask 1040384
        %v378 = vsel %vm376, %v364, 0
        %380 = vmatprep.subr.mxu0 0.0
        %381 = vmatpush1.msra.mxu0 %v361
        %382 = vmatprep.subr.mxu0 0.0
        %383 = vmatpush1.msra.mxu0 %v362
        %384 = vmatprep.subr.mxu0 0.0
        %385 = vmatpush1.msra.mxu0 %v363
        %386 = vmatprep.subr.mxu0 0.0
        %387 = vmatpush1.msra.mxu0 %v378
        %388 = vmatprep.subr.mxu0 0.0
        %389 = vmatpush1.msra.mxu0 0.0
        %390 = vmatprep.subr.mxu0 0.0
        %391 = vmatpush1.msra.mxu0 0.0
        %392 = vmatprep.subr.mxu0 0.0
        %393 = vmatpush1.msra.mxu0 0.0
        %394 = vmatprep.subr.mxu0 0.0
        %395 = vmatpush1.msra.mxu0 0.0
        %396 = vmatprep.subr.mxu0 0.0
        %397 = vmatpush1.msra.mxu0 0.0
        %398 = vmatprep.subr.mxu0 0.0
        %399 = vmatpush1.msra.mxu0 0.0
        %400 = vmatprep.subr.mxu0 0.0
        %401 = vmatpush1.msra.mxu0 0.0
        %402 = vmatprep.subr.mxu0 0.0
        %403 = vmatpush1.msra.mxu0 0.0
        %404 = vmatprep.subr.mxu0 0.0
        %405 = vmatpush1.msra.mxu0 0.0
        %406 = vmatprep.subr.mxu0 0.0
        %407 = vmatpush1.msra.mxu0 0.0
        %408 = vmatprep.subr.mxu0 0.0
        %409 = vmatpush1.msra.mxu0 0.0
        %410 = vmatprep.subr.mxu0 0.0
        %411 = vmatpush1.msra.mxu0 0.0
        %412 = vmatprep.subr.mxu0 0.0
        %413 = vmatpush1.msra.mxu0 0.0
        %414 = vmatprep.subr.mxu0 0.0
        %415 = vmatpush1.msra.mxu0 0.0
        %416 = vmatprep.subr.mxu0 0.0
        %417 = vmatpush1.msra.mxu0 0.0
        %418 = vmatprep.subr.mxu0 0.0
        %419 = vmatpush1.msra.mxu0 0.0
        %420 = vmatprep.subr.mxu0 0.0
        %421 = vmatpush1.msra.mxu0 0.0
        %422 = vmatprep.subr.mxu0 0.0
        %423 = vmatpush1.msra.mxu0 0.0
        %424 = vmatprep.subr.mxu0 0.0
        %425 = vmatpush1.msra.mxu0 0.0
        %426 = vmatprep.subr.mxu0 0.0
        %427 = vmatpush1.msra.mxu0 0.0
        %428 = vmatprep.subr.mxu0 0.0
        %429 = vmatpush1.msra.mxu0 0.0
        %430 = vmatprep.subr.mxu0 0.0
        %431 = vmatpush1.msra.mxu0 0.0
        %432 = vmatprep.subr.mxu0 0.0
        %433 = vmatpush1.msra.mxu0 0.0
        %434 = vmatprep.subr.mxu0 0.0
        %435 = vmatpush1.msra.mxu0 0.0
        %436 = vmatprep.subr.mxu0 0.0
        %437 = vmatpush1.msra.mxu0 0.0
        %438 = vmatprep.subr.mxu0 0.0
        %439 = vmatpush1.msra.mxu0 0.0
        %440 = vmatprep.subr.mxu0 0.0
        %441 = vmatpush1.msra.mxu0 0.0
        %442 = vmatprep.subr.mxu0 0.0
        %443 = vmatpush1.msra.mxu0 0.0
        %444 = vmatprep.mubr.f32.mxu0 0.0
        %445 = vmatmul.mubr.f32.gmra.mrb[0].mxu0 %v374
        %v446 = vpop.f32.mrb[0].mxu0
        %v447 = vadd.f32 %v370, %v446
        %v448 = vpop.f32.mrb[0].mxu0
        %449 = vdwg.mxu0
        %v450 = vlaneseq
        %v451 = vand.u32 %v450, 127
        %vm452 = vcmp.ge.s32.totalorder %v451, 25
        %vm453 = vcmp.gt.f32.partialorder %v447, 0.0
        %vm454 = vmor %vm452, %vm453
        %v455 = vmul.f32 %v447, 0.01
        %v456 = vsel %vm454, %v447, %v455
        %v457 = vld [vmem:[%s349] sm:$0x1]
        %v458 = vld [vmem:[%s2] sm:$0x1]
        %v459 = vld [vmem:[%s352] sm:$0x1]
        %v460 = vld [vmem:[%s6] sm:$0x1]
        %v462 = vlaneseq
        %v463 = vshrl.u32 %v462, 7
        %v464 = vsub.s32 0, %v463
        %v465 = vrot.slane %v457, %v464
        %v467 = vmul.f32 %v456, %v465
        %vm468 = vcmask 408576
        %v469 = vsel %vm468, %v467, 0.0
        %470 = vadd.xlane.f32.xlu0 %v469
        %v471 = vpop.xlane.xlu0 %470
        %v473 = vlaneseq
        %v474 = vshrl.u32 %v473, 7
        %v475 = vsub.s32 0, %v474
        %v476 = vrot.slane %v460, %v475
        %v478 = vadd.f32 %v471, %v476
        %v480 = vlaneseq
        %v481 = vshrl.u32 %v480, 7
        %v482 = vsub.s32 0, %v481
        %v483 = vrot.slane %v458, %v482
        %v485 = vmul.f32 %v456, %v483
        %v486 = vsel %vm468, %v485, 0.0
        %487 = vadd.xlane.f32.xlu0 %v486
        %v488 = vpop.xlane.xlu0 %487
        %v489 = vadd.f32 %v488, %v476
        %v490 = vmax.f32 %v489, 0.0
        %vm491 = vcmp.ne.f32.partialorder %v489, %v489
        %v492 = vadd.f32 %v489, 0.0
        %v493 = vand.u32 2147483647, %v489
        %v494 = vsub.f32 0.0, %v493
        %v495 = vmul.f32 %v494, 1.442695
        %v496 = vpow.pop %v495
        %v497 = vadd.f32 %v496, 1.0
        %v498 = vlog2.pop %v497
        %v499 = vmul.f32 %v498, 0.6931472
        %v500 = vmul.f32 -0.5, %v496
        %v501 = vadd.f32 %v500, 1.0
        %v502 = vmul.f32 %v501, %v496
        %v503 = vand.u32 2147483647, %v496
        %vm504 = vcmp.lt.f32.partialorder %v503, 0.0004427343
        %v505 = vsel %vm504, %v502, %v499
        %v506 = vadd.f32 %v490, %v505
        %v507 = vsel %vm491, %v492, %v506
        %v508 = vmul.f32 %v456, %v456
        %v510 = vlaneseq
        %v511 = vshrl.u32 %v510, 7
        %v512 = vsub.s32 0, %v511
        %v513 = vrot.slane %v459, %v512
        %v515 = vmul.f32 %v508, %v513
        %v516 = vsel %vm468, %v515, 0.0
        %517 = vadd.xlane.f32.xlu0 %v516
        %v518 = vpop.xlane.xlu0 %517
        %v519 = vmul.f32 %v507, %v507
        %v520 = vadd.f32 %v519, %v518
        %v521 = vrsqrt.pop %v520
        %v522 = vmul.f32 %v520, %v521
        %vm523 = vcmp.eq.f32.partialorder %v520, inf
        %v524 = vsel %vm523, %v520, %v522
        %vm525 = vcmp.eq.f32.partialorder %v520, 0.0
        %v526 = vand.u32 %v520, 2147483648
        %v527 = vsel %vm525, %v526, %v524
        %vm528 = vcmask 7168
        %v529 = vsel %vm528, %v478, %v527
        %vm530 = vcmask 15360
        %531 = vst.msk [vmem:[%s359] sm:$0xff] %vm530, %v529
        %p532 = scmp.lt.s32.totalorder %s26, 1
        %s533 = scalar_select %p532, %s26, 1
        %p534 = scmp.lt.s32.totalorder %s27, 0
        %s535 = scalar_select %p534, %s27, 0
        %s536 = sadd.s32 %s535, %s533
        %s537 = smul.addr %s536, 8
        %s538 = scalar_lea.vmem %s7, %s537
        // Predicated region
        $region57: #{tpu_custom_call.1} parent=47 // pred_check
          %p539 = pneg %p218
        $region58: #{tpu_custom_call.1} parent=47 // pred_check_branch
          %541 = sbr.rel (%p539) target = $region60
        $region59: #{tpu_custom_call.1} parent=47 // pred_region
          _
        $region60: #{tpu_custom_call.1} parent=47 // pred_fallthru
          _
      $region48: #{tpu_custom_call.1} parent=5 // pred_fallthru
        _
      %p542 = scmp.le.s32.totalorder 2, %s17
      // Predicated region
      $region61: #{tpu_custom_call.1} parent=5 // pred_check
        %p543 = pneg %p542
      $region62: #{tpu_custom_call.1} parent=5 // pred_check_branch
        %545 = sbr.rel (%p543) target = $region64
      $region63: #{tpu_custom_call.1} parent=5 // pred_region
        %s546 = ssub.s32 %s17, 2
        // Predicated region
        $region65: #{tpu_custom_call.1} parent=63 // pred_check
          %p547 = pneg %p224
        $region66: #{tpu_custom_call.1} parent=63 // pred_check_branch
          %549 = sbr.rel (%p547) target = $region68
        $region67: #{tpu_custom_call.1} parent=63 // pred_region
          %p550 = scmp.lt.s32.totalorder %s28, 1
          %s551 = scalar_select %p550, %s28, 1
          %p552 = scmp.lt.s32.totalorder %s29, 0
          %s553 = scalar_select %p552, %s29, 0
          %s554 = sadd.s32 %s553, %s551
          %s555 = smul.addr %s554, 8
          %s556 = scalar_lea.vmem %s7, %s555
        $region68: #{tpu_custom_call.1} parent=63 // pred_fallthru
          _
      $region64: #{tpu_custom_call.1} parent=5 // pred_fallthru
        _
    $region6: #{tpu_custom_call.1} parent=1 // loop_footer
      %s21 = sadd.s32 1, %s17
    $region7: #{tpu_custom_call.1} parent=1 // loop_footer_branch
      %16 = sbr.rel target = $region3
    $region8: #{tpu_custom_call.1} parent=1 // loop_exit
      _
    %557 = vsyncpa [#allocation3], 1
    %s558 = scalar_lea.sflag [#allocation3], 1
    %559 = vsyncpa %s558, 1
    %560 = vsyncpa [#allocation5], 1

</llo_original>
